<compile_context>
chip_gen: v5e
topology: v5e:2x2
jax: 0.10.0
libtpu: 0.0.40
codegen_flags: <defaults>
</compile_context>

<pallas_src>
import functools
import math

import jax
import jax.numpy as jnp
from jax import lax
from jax.experimental import pallas as pl
from jax.experimental.pallas import tpu as pltpu

EPS = 1e-6
NEG_INF_BIAS = -1e9          # torch masked_fill value in the reference attention
MXU_DTYPE = jnp.bfloat16     # matmul operand dtype (accumulation stays f32)


# ------------------------------ tiling helpers -------------------------------
def _round_up(x, m):
    return -(-x // m) * m


def _tile_lanes(dim, target):
    """Lane (last-dim) tile: multiple of 128 dividing dim, else the full dim."""
    if dim <= target:
        return dim
    t = (min(target, dim) // 128) * 128
    while t >= 128:
        if dim % t == 0:
            return t
        t -= 128
    return dim


def _tile_rows(dim, target):
    """Sublane (second-minor) tile: multiple of 8 dividing dim, else full dim."""
    if dim <= target:
        return dim
    t = (min(target, dim) // 8) * 8
    while t >= 8:
        if dim % t == 0:
            return t
        t -= 8
    return dim


def _hw_config():
    """Generation-specific VMEM cap + tile targets (v5e/v6e vs v7x)."""
    vmem = 64 * 1024 * 1024
    try:
        info = pltpu.get_tpu_info()
        vmem = int(getattr(info, "vmem_capacity_bytes", vmem))
    except Exception:
        pass
    if vmem >= 96 * 1024 * 1024:
        # v5e / v6e: 128 MiB physical VMEM, lower HBM BW -> big tiles to cut
        # weight / KV re-streaming.
        return dict(vmem_limit=100 * 1024 * 1024,
                    tm=512, tn=512, tk=1024, rows=1024, tq=512, tkv=512)
    # v7x: 64 MiB per TensorCore -> ~48 MiB scoped limit, moderate tiles.
    return dict(vmem_limit=48 * 1024 * 1024,
                tm=256, tn=512, tk=512, rows=1024, tq=512, tkv=512)


# ----------------------------- LayerNorm kernel ------------------------------
def _layernorm_kernel(x_ref, a_ref, b_ref, o_ref, *, eps):
    x = x_ref[...].astype(jnp.float32)
    n = x.shape[-1]
    mean = jnp.mean(x, axis=-1, keepdims=True)
    d = x - mean
    # torch.Tensor.std is unbiased (N-1); eps is added to the std (matches the
    # custom LayerNorm in the reference module, not nn.LayerNorm).
    var = jnp.sum(d * d, axis=-1, keepdims=True) * (1.0 / (n - 1))
    inv = 1.0 / (jnp.sqrt(var) + eps)          # exact divide on [tm, 1]
    y = a_ref[...].astype(jnp.float32) * (d * inv) + b_ref[...].astype(jnp.float32)
    o_ref[...] = y.astype(o_ref.dtype)


def layernorm(x, a2, b2, cfg):
    B, S, D = x.shape
    M = B * S
    x2 = x.reshape(M, D)
    tm = min(cfg["rows"], _round_up(M, 8))
    Mp = _round_up(M, tm)                      # pad rows so tiling stays legal
    if Mp != M:
        x2 = jnp.pad(x2, ((0, Mp - M), (0, 0)))
    out = pl.pallas_call(
        functools.partial(_layernorm_kernel, eps=EPS),
        out_shape=jax.ShapeDtypeStruct((Mp, D), x.dtype),
        grid=(Mp // tm,),
        in_specs=[
            pl.BlockSpec((tm, D), lambda i: (i, 0)),
            pl.BlockSpec((1, D), lambda i: (0, 0)),
            pl.BlockSpec((1, D), lambda i: (0, 0)),
        ],
        out_specs=pl.BlockSpec((tm, D), lambda i: (i, 0)),
        compiler_params=pltpu.CompilerParams(
            dimension_semantics=("parallel",),
            vmem_limit_bytes=cfg["vmem_limit"]),
    )(x2, a2.reshape(1, D), b2.reshape(1, D))
    if Mp != M:
        out = out[:M]
    return out.reshape(B, S, D)


# ------------------------------ Linear kernel --------------------------------
def _linear_kernel(*refs, activation, has_residual, fuse_ln, eps):
    it = iter(refs)
    x_ref = next(it)
    w_ref = next(it)
    b_ref = next(it)
    r_ref = next(it) if has_residual else None
    if fuse_ln:
        ga_ref = next(it)
        gb_ref = next(it)
    o_ref = next(it)
    oln_ref = next(it) if fuse_ln else None
    acc_ref = next(it)

    k = pl.program_id(2)

    @pl.when(k == 0)
    def _():
        acc_ref[...] = jnp.zeros_like(acc_ref)

    x = x_ref[...]
    if x.ndim == 3:            # (1, tm, tk) plane view
        x = x[0]
    w = w_ref[...]
    if w.ndim == 3:            # (1, tk, tn) plane view (fused QKV weight)
        w = w[0]
    # bf16 operands to the MXU, f32 accumulation.
    acc_ref[...] += jnp.dot(x.astype(MXU_DTYPE), w.astype(MXU_DTYPE),
                            preferred_element_type=jnp.float32)

    @pl.when(k == pl.num_programs(2) - 1)
    def _():
        b = b_ref[...]
        if b.ndim == 3:
            b = b[0]
        y = acc_ref[...] + b.astype(jnp.float32)
        if activation == "relu":
            y = jnp.maximum(y, 0.0)
        if has_residual:
            y = y + r_ref[...].astype(jnp.float32)      # fused residual add
        y_out = y.astype(o_ref.dtype)
        if len(o_ref.shape) == 3:                       # (1, tm, tn) plane out
            o_ref[0] = y_out
        else:
            o_ref[...] = y_out
        if fuse_ln:
            # Fused LayerNorm epilogue (requires the full feature row: tn == N).
            n = y.shape[-1]
            mean = jnp.mean(y, axis=-1, keepdims=True)
            d = y - mean
            var = jnp.sum(d * d, axis=-1, keepdims=True) * (1.0 / (n - 1))
            inv = 1.0 / (jnp.sqrt(var) + eps)
            yln = (ga_ref[...].astype(jnp.float32) * (d * inv)
                   + gb_ref[...].astype(jnp.float32))
            oln_ref[...] = yln.astype(oln_ref.dtype)


def linear(x, w, b, cfg, *, activation="none", residual=None,
           ln_scale=None, ln_shift=None):
    """y = act(x @ w + b) [+ residual].  If ln_scale/ln_shift are given, also
    returns LayerNorm(y) computed in the matmul epilogue (tn forced to N)."""
    orig_shape = x.shape
    K = orig_shape[-1]
    M = int(math.prod(orig_shape[:-1]))
    N = w.shape[-1]
    fuse_ln = ln_scale is not None

    x2 = x.reshape(M, K)
    r2 = residual.reshape(M, N) if residual is not None else None

    tm = min(cfg["tm"], _round_up(M, 8))
    Mp = _round_up(M, tm)
    if Mp != M:
        x2 = jnp.pad(x2, ((0, Mp - M), (0, 0)))
        if r2 is not None:
            r2 = jnp.pad(r2, ((0, Mp - M), (0, 0)))
    tn = N if fuse_ln else _tile_lanes(N, cfg["tn"])
    tk = _tile_lanes(K, cfg["tk"])
    grid = (Mp // tm, N // tn, K // tk)

    in_specs = [
        pl.BlockSpec((tm, tk), lambda i, j, k: (i, k)),
        pl.BlockSpec((tk, tn), lambda i, j, k: (k, j)),
        pl.BlockSpec((1, tn), lambda i, j, k: (0, j)),
    ]
    args = [x2, w, b.reshape(1, N)]
    if r2 is not None:
        in_specs.append(pl.BlockSpec((tm, tn), lambda i, j, k: (i, j)))
        args.append(r2)
    if fuse_ln:
        in_specs.append(pl.BlockSpec((1, N), lambda i, j, k: (0, 0)))
        in_specs.append(pl.BlockSpec((1, N), lambda i, j, k: (0, 0)))
        args += [ln_scale.reshape(1, N), ln_shift.reshape(1, N)]

    out_shapes = [jax.ShapeDtypeStruct((Mp, N), x.dtype)]
    out_specs = [pl.BlockSpec((tm, tn), lambda i, j, k: (i, j))]
    if fuse_ln:
        out_shapes.append(jax.ShapeDtypeStruct((Mp, N), x.dtype))
        out_specs.append(pl.BlockSpec((tm, N), lambda i, j, k: (i, 0)))

    outs = pl.pallas_call(
        functools.partial(_linear_kernel, activation=activation,
                          has_residual=r2 is not None, fuse_ln=fuse_ln, eps=EPS),
        out_shape=tuple(out_shapes) if fuse_ln else out_shapes[0],
        grid=grid,
        in_specs=in_specs,
        out_specs=tuple(out_specs) if fuse_ln else out_specs[0],
        scratch_shapes=[pltpu.VMEM((tm, tn), jnp.float32)],
        compiler_params=pltpu.CompilerParams(
            dimension_semantics=("parallel", "parallel", "arbitrary"),
            vmem_limit_bytes=cfg["vmem_limit"]),
    )(*args)

    def _fin(o):
        if Mp != M:
            o = o[:M]
        return o.reshape(orig_shape[:-1] + (N,))

    if fuse_ln:
        return _fin(outs[0]), _fin(outs[1])
    return _fin(outs)


def linear_qkv(x, w3, b3, cfg):
    """Fused QKV projection.  w3: [3, K, D], b3: [3, 1, D].
    Output layout is [3, B, S, D] (q/k/v planes) so the attention kernel can
    read q/k/v straight from the fused array — no JAX-level slicing copies."""
    B, S, K = x.shape
    D = w3.shape[-1]
    M = B * S
    x2 = x.reshape(M, K)
    tm = min(cfg["tm"], _round_up(M, 8))
    Mp = _round_up(M, tm)
    if Mp != M:
        x2 = jnp.pad(x2, ((0, Mp - M), (0, 0)))
    tk = _tile_lanes(K, cfg["tk"])
    grid = (Mp // tm, 3, K // tk)

    out = pl.pallas_call(
        functools.partial(_linear_kernel, activation="none",
                          has_residual=False, fuse_ln=False, eps=EPS),
        out_shape=jax.ShapeDtypeStruct((3, Mp, D), x.dtype),
        grid=grid,
        in_specs=[
            pl.BlockSpec((tm, tk), lambda i, j, k: (i, k)),
            pl.BlockSpec((1, tk, D), lambda i, j, k: (j, k, 0)),
            pl.BlockSpec((1, 1, D), lambda i, j, k: (j, 0, 0)),
        ],
        out_specs=pl.BlockSpec((1, tm, D), lambda i, j, k: (j, i, 0)),
        scratch_shapes=[pltpu.VMEM((tm, D), jnp.float32)],
        compiler_params=pltpu.CompilerParams(
            dimension_semantics=("parallel", "parallel", "arbitrary"),
            vmem_limit_bytes=cfg["vmem_limit"]),
    )(x2, w3, b3)
    if Mp != M:
        out = out[:, :M]
    return out.reshape(3, B, S, D)


# ------------------ Attention core (lane-dense, KV-streamed) ------------------
def _mha_kernel(q_ref, k_ref, v_ref, bias_ref, o_ref,
                m_ref, l_ref, acc_ref, *, num_heads, scale):
    kv_idx = pl.program_id(2)

    @pl.when(kv_idx == 0)
    def _():
        m_ref[...] = jnp.full(m_ref.shape, -jnp.inf, jnp.float32)
        l_ref[...] = jnp.zeros_like(l_ref)
        acc_ref[...] = jnp.zeros_like(acc_ref)

    # q/k/v blocks are (1, 1, t, D) views of the fused [3, B, S, D] qkv array.
    # Scale folded into q once per step (one [tq, D] mul instead of H [tq, tkv]
    # muls); MXU operands fed in bf16, accumulation in f32.
    q = (q_ref[0, 0].astype(jnp.float32) * scale).astype(MXU_DTYPE)   # [tq, D]
    k = k_ref[0, 0].astype(MXU_DTYPE)                                  # [tkv, D]
    v = v_ref[0, 0].astype(MXU_DTYPE)                                  # [tkv, D]
    bias = bias_ref[0].astype(jnp.float32)        # [1, tkv] or [tq, tkv], additive

    dk = q.shape[-1] // num_heads
    dims_nt = (((1,), (1,)), ((), ()))   # contract last dims: q . k^T, no transpose
    dims_nn = (((1,), (0,)), ((), ()))   # plain matmul: p . v

    for h in range(num_heads):
        lo, hi = h * dk, (h + 1) * dk
        s = lax.dot_general(q[:, lo:hi], k[:, lo:hi], dims_nt,
                            preferred_element_type=jnp.float32)        # [tq, tkv]
        s = s + bias                      # additive mask bias (broadcast over tq)
        m_prev = m_ref[h]                                               # [tq, 1]
        m_new = jnp.maximum(m_prev, jnp.max(s, axis=-1, keepdims=True))
        alpha = jnp.exp(m_prev - m_new)
        p = jnp.exp(s - m_new)
        # In-place per-head full-block state updates: vreg pressure is bounded
        # to one head and there are no concatenates / relayouts in the hot loop.
        l_ref[h] = alpha * l_ref[h] + jnp.sum(p, axis=-1, keepdims=True)
        acc_ref[h] = alpha * acc_ref[h] + lax.dot_general(
            p.astype(MXU_DTYPE), v[:, lo:hi], dims_nn,
            preferred_element_type=jnp.float32)
        m_ref[h] = m_new

    @pl.when(kv_idx == pl.num_programs(2) - 1)
    def _():
        # Finalize once per (b, q) block: H small stores (amortised over the
        # whole KV stream), exact reciprocal for the softmax normalisation.
        for h in range(num_heads):
            inv = 1.0 / l_ref[h]                                        # [tq, 1]
            o_ref[0, :, h * dk:(h + 1) * dk] = (acc_ref[h] * inv).astype(o_ref.dtype)


def attention_core(qkv, bias, num_heads, cfg):
    """qkv: [3, B, S, D] fused projection output; bias: additive f32 mask bias,
    thin [B, 1, S] (padding mask) or full [B, S, S].  Returns [B, S, D]."""
    _, B, S, D = qkv.shape
    dk = D // num_heads
    scale = 1.0 / math.sqrt(dk)
    tq = _tile_rows(S, cfg["tq"])
    tkv = _tile_lanes(S, cfg["tkv"])
    grid = (B, S // tq, S // tkv)

    if bias.shape[1] == 1:      # thin padding mask: (1,1,tkv) blocks, broadcast over tq
        bias_spec = pl.BlockSpec((1, 1, tkv), lambda b, qi, ki: (b, 0, ki))
    else:                       # full attention mask
        bias_spec = pl.BlockSpec((1, tq, tkv), lambda b, qi, ki: (b, qi, ki))

    return pl.pallas_call(
        functools.partial(_mha_kernel, num_heads=num_heads, scale=scale),
        out_shape=jax.ShapeDtypeStruct((B, S, D), qkv.dtype),
        grid=grid,
        in_specs=[
            pl.BlockSpec((1, 1, tq, D), lambda b, qi, ki: (0, b, qi, 0)),
            pl.BlockSpec((1, 1, tkv, D), lambda b, qi, ki: (1, b, ki, 0)),
            pl.BlockSpec((1, 1, tkv, D), lambda b, qi, ki: (2, b, ki, 0)),
            bias_spec,
        ],
        out_specs=pl.BlockSpec((1, tq, D), lambda b, qi, ki: (b, qi, 0)),
        scratch_shapes=[
            pltpu.VMEM((num_heads, tq, 1), jnp.float32),    # running max m
            pltpu.VMEM((num_heads, tq, 1), jnp.float32),    # running sum l
            pltpu.VMEM((num_heads, tq, dk), jnp.float32),   # per-head output acc
        ],
        compiler_params=pltpu.CompilerParams(
            dimension_semantics=("parallel", "parallel", "arbitrary"),
            vmem_limit_bytes=cfg["vmem_limit"]),
    )(qkv, qkv, qkv, bias)


# ---------------------------- Module-level logic ------------------------------
def make_mask_bias(mask, B, S):
    """Convert a {0,1} mask ([B,S], [B,1,S], [B,S,S], [B,1,*,S]) into an
    additive f32 bias, kept thin ([B,1,S]) whenever possible."""
    m = mask
    if m.ndim == 2:
        m = m[:, None, :]
    elif m.ndim == 4:
        # TODO(synk): per-head masks ([B,H,S,S]) are not supported; the torch
        # reference only ever passes a head-broadcast mask.
        m = m[:, 0]
    m = m.astype(jnp.float32)
    return jnp.where(m > 0.5, 0.0, NEG_INF_BIAS)


def encoder(params, x, mask):
    """Pre-norm Transformer Encoder stack + final LayerNorm.

    Only the very first LayerNorm is a standalone pass; every other LayerNorm
    (including the final one) is fused into the epilogue of the matmul that
    produces its input, which also carries the residual stream forward.
    Dropout is identity (eval mode)."""
    cfg = _hw_config()
    B, S, D = x.shape
    bias = make_mask_bias(mask, B, S)

    layers = params["layers"]
    n = len(layers)
    y = layernorm(x, layers[0]["ln0_a"], layers[0]["ln0_b"], cfg)   # LN0 of layer 0
    x_res = x
    for i, p in enumerate(layers):
        # ---- self-attention sublayer: x_res + W_o(attn(LN0(x_res))) ----
        qkv = linear_qkv(y, p["w_qkv"], p["b_qkv"], cfg)            # [3, B, S, D]
        ctx = attention_core(qkv, bias, p["h"], cfg)                # [B, S, D]
        x_res, y = linear(ctx, p["wo"], p["bo"], cfg, residual=x_res,
                          ln_scale=p["ln1_a"], ln_shift=p["ln1_b"])
        # ---- feed-forward sublayer: x_res + W2(relu(W1(LN1(x_res)))) ----
        h = linear(y, p["w1"], p["b1"], cfg, activation="relu")
        if i + 1 < n:
            na, nb = layers[i + 1]["ln0_a"], layers[i + 1]["ln0_b"]
        else:
            na, nb = params["ln_f_a"], params["ln_f_b"]             # final LN fused
        x_res, y = linear(h, p["w2"], p["b2"], cfg, residual=x_res,
                          ln_scale=na, ln_shift=nb)
    return y


# ------------------------------- Param init -----------------------------------
def init_layer_params(key, d_model, h, d_ff):
    ks = jax.random.split(key, 6)

    def lin(kk, din, dout):
        w = jax.random.normal(kk, (din, dout), jnp.float32) * 0.05
        b = jnp.zeros((dout,), jnp.float32)
        return w, b

    wq, bq = lin(ks[0], d_model, d_model)
    wk, bk = lin(ks[1], d_model, d_model)
    wv, bv = lin(ks[2], d_model, d_model)
    wo, bo = lin(ks[3], d_model, d_model)
    w1, b1 = lin(ks[4], d_model, d_ff)
    w2, b2 = lin(ks[5], d_ff, d_model)
    ones = jnp.ones((d_model,), jnp.float32)
    zeros = jnp.zeros((d_model,), jnp.float32)
    return dict(
        h=h,
        # Fused QKV projection stored as [3, D, D] weight planes / [3, 1, D]
        # bias planes so the projection output is already laid out as q/k/v
        # planes for the attention kernel.
        w_qkv=jnp.stack([wq, wk, wv], axis=0),
        b_qkv=jnp.stack([bq, bk, bv], axis=0)[:, None, :],
        wo=wo, bo=bo, w1=w1, b1=b1, w2=w2, b2=b2,
        ln0_a=ones, ln0_b=zeros, ln1_a=ones, ln1_b=zeros,
    )


def init_encoder_params(key, n_layers, d_model, h, d_ff):
    keys = jax.random.split(key, n_layers)
    layers = [init_layer_params(keys[i], d_model, h, d_ff) for i in range(n_layers)]
    return dict(
        layers=layers,
        ln_f_a=jnp.ones((d_model,), jnp.float32),
        ln_f_b=jnp.zeros((d_model,), jnp.float32),
    )


if __name__ == "__main__":
    B, S, D, H, D_FF, N_LAYERS = 2, 8, 32, 4, 64, 2
    key = jax.random.PRNGKey(0)
    kx, kp = jax.random.split(key, 2)

    x = jax.random.normal(kx, (B, S, D), jnp.float32)
    # padding-style source mask [B, 1, S]; batch 1 has its last 2 positions masked
    mask = jnp.ones((B, 1, S), jnp.float32).at[1, 0, S - 2:].set(0.0)

    params = init_encoder_params(kp, N_LAYERS, D, H, D_FF)

    out = encoder(params, x, mask)
    out = jax.block_until_ready(out)
    assert out.shape == (B, S, D) and out.dtype == jnp.float32
    assert bool(jnp.all(jnp.isfinite(out)))
    print("KERNEL_OK")
</pallas_src>

<mosaic_0001>
module attributes {stable_mosaic.version = 11 : i64} {
  func.func @_layernorm_kernel(%arg0: i32, %arg1: memref<16x32xf32, #tpu.memory_space<vmem>>, %arg2: memref<1x32xf32, #tpu.memory_space<vmem>>, %arg3: memref<1x32xf32, #tpu.memory_space<vmem>>, %arg4: memref<16x32xf32, #tpu.memory_space<vmem>>) attributes {dimension_semantics = [#tpu.dimension_semantics<parallel>], iteration_bounds = array<i64: 1>, scalar_prefetch = 0 : i64, scratch_operands = 0 : i64, tpu.core_type = #tpu.core_type<tc>, window_params = [{transform_indices = @transform_0, window_bounds = array<i64: 16, 32>}, {pipeline_mode = #tpu.pipeline_mode<synchronous>, transform_indices = @transform_1, window_bounds = array<i64: 1, 32>}, {pipeline_mode = #tpu.pipeline_mode<synchronous>, transform_indices = @transform_2, window_bounds = array<i64: 1, 32>}, {transform_indices = @transform_3, window_bounds = array<i64: 16, 32>}]} {
    %c0 = arith.constant 0 : index
    %c0_0 = arith.constant 0 : index
    %0 = vector.load %arg1[%c0, %c0_0] : memref<16x32xf32, #tpu.memory_space<vmem>>, vector<16x32xf32>
    %cst = arith.constant dense<0.000000e+00> : vector<16xf32>
    %1 = vector.multi_reduction <add>, %0, %cst [1] : vector<16x32xf32> to vector<16xf32>
    %2 = vector.shape_cast %1 : vector<16xf32> to vector<16x1xf32>
    %cst_1 = arith.constant 3.200000e+01 : f32
    %3 = vector.broadcast %cst_1 : f32 to vector<16x1xf32>
    %4 = arith.divf %2, %3 : vector<16x1xf32>
    %5 = vector.broadcast %4 : vector<16x1xf32> to vector<16x32xf32>
    %6 = arith.subf %0, %5 : vector<16x32xf32>
    %7 = arith.mulf %6, %6 : vector<16x32xf32>
    %cst_2 = arith.constant dense<0.000000e+00> : vector<16xf32>
    %8 = vector.multi_reduction <add>, %7, %cst_2 [1] : vector<16x32xf32> to vector<16xf32>
    %9 = vector.shape_cast %8 : vector<16xf32> to vector<16x1xf32>
    %cst_3 = arith.constant 0.0322580636 : f32
    %10 = vector.broadcast %cst_3 : f32 to vector<16x1xf32>
    %11 = arith.mulf %9, %10 : vector<16x1xf32>
    %12 = math.sqrt %11 : vector<16x1xf32>
    %cst_4 = arith.constant 9.99999997E-7 : f32
    %13 = vector.broadcast %cst_4 : f32 to vector<16x1xf32>
    %14 = arith.addf %12, %13 : vector<16x1xf32>
    %cst_5 = arith.constant 1.000000e+00 : f32
    %15 = vector.broadcast %cst_5 : f32 to vector<16x1xf32>
    %16 = arith.divf %15, %14 : vector<16x1xf32>
    %c0_6 = arith.constant 0 : index
    %c0_7 = arith.constant 0 : index
    %17 = vector.load %arg2[%c0_6, %c0_7] : memref<1x32xf32, #tpu.memory_space<vmem>>, vector<1x32xf32>
    %18 = vector.broadcast %16 : vector<16x1xf32> to vector<16x32xf32>
    %19 = arith.mulf %6, %18 : vector<16x32xf32>
    %20 = vector.broadcast %17 : vector<1x32xf32> to vector<16x32xf32>
    %21 = arith.mulf %20, %19 : vector<16x32xf32>
    %c0_8 = arith.constant 0 : index
    %c0_9 = arith.constant 0 : index
    %22 = vector.load %arg3[%c0_8, %c0_9] : memref<1x32xf32, #tpu.memory_space<vmem>>, vector<1x32xf32>
    %23 = vector.broadcast %22 : vector<1x32xf32> to vector<16x32xf32>
    %24 = arith.addf %21, %23 : vector<16x32xf32>
    %c0_10 = arith.constant 0 : index
    %c0_11 = arith.constant 0 : index
    %25 = vector.load %arg4[%c0_10, %c0_11] : memref<16x32xf32, #tpu.memory_space<vmem>>, vector<16x32xf32>
    tpu.vector_store %arg4[%c0_10, %c0_11], %24 {strides = array<i32>} : memref<16x32xf32, #tpu.memory_space<vmem>>, vector<16x32xf32>,
    return
  }
  func.func @transform_0(%arg0: i32) -> (i32, i32) {
    %c0_i32 = arith.constant 0 : i32
    %c0_i32_0 = arith.constant 0 : i32
    return %arg0, %c0_i32 : i32, i32
  }
  func.func @transform_1(%arg0: i32) -> (i32, i32) {
    %c0_i32 = arith.constant 0 : i32
    %c0_i32_0 = arith.constant 0 : i32
    %c0_i32_1 = arith.constant 0 : i32
    return %c0_i32, %c0_i32_0 : i32, i32
  }
  func.func @transform_2(%arg0: i32) -> (i32, i32) {
    %c0_i32 = arith.constant 0 : i32
    %c0_i32_0 = arith.constant 0 : i32
    %c0_i32_1 = arith.constant 0 : i32
    return %c0_i32, %c0_i32_0 : i32, i32
  }
  func.func @transform_3(%arg0: i32) -> (i32, i32) {
    %c0_i32 = arith.constant 0 : i32
    %c0_i32_0 = arith.constant 0 : i32
    return %arg0, %c0_i32 : i32, i32
  }
}

</mosaic_0001>

<llo_original>
// kernel: tpu_custom_call.1
$region0: #{tpu_custom_call.1}
  #allocation0 [shape = 'u32[]', space=smem, size = 0x4, offset = 0x4, fixed_abs, tag = 'smem constant byte address 0x4 - core index']
  #allocation1 [shape = 'u32[72,128]{1,0:T(1,128)}', space=vmem, size = 0x9000, scoped, tag = 'internal scratch']
  %s0 = inlined_call_operand.hbm [shape: f32[16,32], index: 0, kind: input, shape index: {}]
  %s1 = inlined_call_operand.hbm [shape: f32[1,32], index: 1, kind: input, shape index: {}]
  %s2 = inlined_call_operand.vmem [shape: f32[1,32], index: 2, kind: input, shape index: {}]
  %s3 = inlined_call_operand.hbm [shape: f32[16,32], index: 3, kind: output, shape index: {}]
  %s4 = sld [smem:[#allocation0]]
  $region30: #{tpu_custom_call.1} parent=0
    _
  %s6 = ssub.s32 1, %s4
  %s7 = scalar_select 0, %s6, %s4
  $region1: #{tpu_custom_call.1} parent=0
    #allocation2 [shape = 'u8[8192]{0}', space=vmem, size = 0x2000, scoped, tag = 'input window, operand 0, single buffered']
    #allocation3 [shape = 's32[1]{0}', space=sflag, size = 0x4, scoped, tag = 'scoped memory for tpu_custom_call.1']
    #allocation4 [shape = 's32[1]{0}', space=sflag, size = 0x4, scoped, tag = 'scoped memory for tpu_custom_call.1']
    #allocation5 [shape = 'u8[512]{0}', space=vmem, size = 0x400, scoped, tag = 'input window, operand 1, single buffered']
    #allocation6 [shape = 's32[1]{0}', space=sflag, size = 0x4, scoped, tag = 'scoped memory for tpu_custom_call.1']
    #allocation7 [shape = 'u8[8192]{0}', space=vmem, size = 0x2000, scoped, tag = 'output window, operand 0, single buffered']
    %8 = vsyncpa [#allocation3], 0
    %9 = vsyncpa [#allocation6], 0
    %10 = vsyncpa [#allocation4], 0
    // Predicated region
    $region2: #{tpu_custom_call.1} parent=1 // pred_check
      _
    $region3: #{tpu_custom_call.1} parent=1 // pred_check_branch
      %12 = sbr.rel (0) target = $region5
    $region4: #{tpu_custom_call.1} parent=1 // pred_region
      %14 = vsyncadd [#allocation3], 0
      %s15 = sshll.u32 %s0, 4
      %s16 = int_to_ptr.hbm [resolvable:$true] %s15
      %s17 = sshll.u32 [#allocation2], 4
      %s18 = int_to_ptr.vmem [resolvable:$true] %s17
      %23 = dma.hbm_to_vmem [thread:$0]  %s16, 256, %s18, [#allocation3], 128, 128, 8
    $region5: #{tpu_custom_call.1} parent=1 // pred_fallthru
      _
    // Predicated region
    $region6: #{tpu_custom_call.1} parent=1 // pred_check
      _
    $region7: #{tpu_custom_call.1} parent=1 // pred_check_branch
      %25 = sbr.rel (0) target = $region9
    $region8: #{tpu_custom_call.1} parent=1 // pred_region
      %27 = vsyncadd [#allocation6], 0
      %s29 = sshll.u32 %s1, 4
      %s30 = int_to_ptr.hbm [resolvable:$true] %s29
      %s31 = sshll.u32 [#allocation5], 4
      %s32 = int_to_ptr.vmem [resolvable:$true] %s31
      %34 = dma.hbm_to_vmem [thread:$0]  %s30, 16, %s32, [#allocation6]
    $region9: #{tpu_custom_call.1} parent=1 // pred_fallthru
      _
    // Predicated region
    $region10: #{tpu_custom_call.1} parent=1 // pred_check
      _
    $region11: #{tpu_custom_call.1} parent=1 // pred_check_branch
      %36 = sbr.rel (0) target = $region13
    $region12: #{tpu_custom_call.1} parent=1 // pred_region
      _
    $region13: #{tpu_custom_call.1} parent=1 // pred_fallthru
      _
    // Predicated region
    $region14: #{tpu_custom_call.1} parent=1 // pred_check
      _
    $region15: #{tpu_custom_call.1} parent=1 // pred_check_branch
      %38 = sbr.rel (0) target = $region17
    $region16: #{tpu_custom_call.1} parent=1 // pred_region
      %40 = dma.done [#allocation3], 256
    $region17: #{tpu_custom_call.1} parent=1 // pred_fallthru
      _
    // Predicated region
    $region18: #{tpu_custom_call.1} parent=1 // pred_check
      _
    $region19: #{tpu_custom_call.1} parent=1 // pred_check_branch
      %42 = sbr.rel (0) target = $region21
    $region20: #{tpu_custom_call.1} parent=1 // pred_region
      %44 = dma.done [#allocation6], 16
    $region21: #{tpu_custom_call.1} parent=1 // pred_fallthru
      _
    %v45 = vld [vmem:[#allocation2] sm:$0xff]
    %v46 = vld [vmem:[#allocation2 + $0x8] sm:$0xff]
    %vm47 = vcmask 261120
    %v48 = vsel %vm47, %v45, 0.0
    %49 = vadd.xlane.f32.xlu0 %v48
    %v50 = vpop.xlane.xlu0 %49
    %v51 = vsel %vm47, %v46, 0.0
    %52 = vadd.xlane.f32.xlu0 %v51
    %v53 = vpop.xlane.xlu0 %52
    %v54 = vrcp.pop 32.0
    %v55 = vmul.f32 32.0, %v54
    %v56 = vsub.f32 1.0, %v55
    %v57 = vmul.f32 %v54, %v56
    %v58 = vadd.f32 %v54, %v57
    %vm59 = vweird.f32 %v54
    %v60 = vsel %vm59, %v54, %v58
    %v61 = vmul.f32 %v50, %v60
    %v62 = vmul.f32 %v53, %v60
    %v63 = vsub.f32 %v45, %v61
    %v64 = vsub.f32 %v46, %v62
    %v65 = vmul.f32 %v63, %v63
    %v66 = vmul.f32 %v64, %v64
    %v67 = vsel %vm47, %v65, 0.0
    %68 = vadd.xlane.f32.xlu0 %v67
    %v69 = vpop.xlane.xlu0 %68
    %v70 = vsel %vm47, %v66, 0.0
    %71 = vadd.xlane.f32.xlu0 %v70
    %v72 = vpop.xlane.xlu0 %71
    %v73 = vmul.f32 %v69, 0.032258064
    %v74 = vmul.f32 %v72, 0.032258064
    %v75 = vrsqrt.pop %v73
    %v76 = vmul.f32 %v75, %v73
    %v77 = vmul.f32 %v76, %v75
    %v78 = vmul.f32 0.5, %v77
    %v79 = vsub.f32 1.5, %v78
    %v80 = vmul.f32 %v75, %v79
    %v81 = vmul.f32 %v73, %v80
    %vm82 = vcmp.eq.f32.partialorder %v73, inf
    %v83 = vsel %vm82, %v73, %v81
    %vm84 = vcmp.eq.f32.partialorder %v73, 0.0
    %v85 = vand.u32 %v73, 2147483648
    %v86 = vsel %vm84, %v85, %v83
    %v87 = vrsqrt.pop %v74
    %v88 = vmul.f32 %v87, %v74
    %v89 = vmul.f32 %v88, %v87
    %v90 = vmul.f32 0.5, %v89
    %v91 = vsub.f32 1.5, %v90
    %v92 = vmul.f32 %v87, %v91
    %v93 = vmul.f32 %v74, %v92
    %vm94 = vcmp.eq.f32.partialorder %v74, inf
    %v95 = vsel %vm94, %v74, %v93
    %vm96 = vcmp.eq.f32.partialorder %v74, 0.0
    %v97 = vand.u32 %v74, 2147483648
    %v98 = vsel %vm96, %v97, %v95
    %v99 = vadd.f32 %v86, 1e-06
    %v100 = vadd.f32 %v98, 1e-06
    %v101 = vrcp.pop %v99
    %v102 = vmul.f32 %v99, %v101
    %v103 = vsub.f32 1.0, %v102
    %v104 = vmul.f32 %v101, %v103
    %v105 = vadd.f32 %v101, %v104
    %vm106 = vweird.f32 %v99
    %vm107 = vweird.f32 %v101
    %vm108 = vmor %vm106, %vm107
    %v109 = vsel %vm108, %v101, %v105
    %v110 = vand.u32 2147483647, %v99
    %vm111 = vcmp.eq.f32.partialorder %v110, 8.507059e+37
    %v112 = vand.u32 %v99, 2147483648
    %v113 = vor.u32 1.1754944e-38, %v112
    %v114 = vsel %vm111, %v113, %v109
    %v115 = vmul.f32 1.0, %v114
    %v116 = vrcp.pop %v100
    %v117 = vmul.f32 %v100, %v116
    %v118 = vsub.f32 1.0, %v117
    %v119 = vmul.f32 %v116, %v118
    %v120 = vadd.f32 %v116, %v119
    %vm121 = vweird.f32 %v100
    %vm122 = vweird.f32 %v116
    %vm123 = vmor %vm121, %vm122
    %v124 = vsel %vm123, %v116, %v120
    %v125 = vand.u32 2147483647, %v100
    %vm126 = vcmp.eq.f32.partialorder %v125, 8.507059e+37
    %v127 = vand.u32 %v100, 2147483648
    %v128 = vor.u32 1.1754944e-38, %v127
    %v129 = vsel %vm126, %v128, %v124
    %v130 = vmul.f32 1.0, %v129
    %v131 = vld [vmem:[#allocation5] sm:$0x1]
    %v132 = vmul.f32 %v63, %v115
    %v133 = vmul.f32 %v64, %v130
    %v135 = vperm.slane %v131, 0
    %v137 = vmul.f32 %v135, %v132
    %v138 = vmul.f32 %v135, %v133
    %v139 = vld [vmem:[%s2] sm:$0x1]
    %v141 = vperm.slane %v139, 0
    %v143 = vadd.f32 %v137, %v141
    %v144 = vadd.f32 %v138, %v141
    %145 = vst.msk [vmem:[#allocation7] sm:$0xff] %vm47, %v143
    %146 = vst.msk [vmem:[#allocation7 + $0x8] sm:$0xff] %vm47, %v144
    // Predicated region
    $region22: #{tpu_custom_call.1} parent=1 // pred_check
      _
    $region23: #{tpu_custom_call.1} parent=1 // pred_check_branch
      %148 = sbr.rel (0) target = $region25
    $region24: #{tpu_custom_call.1} parent=1 // pred_region
      %150 = vsyncadd [#allocation4], 0
      %s151 = sshll.u32 [#allocation7], 4
      %s152 = int_to_ptr.vmem [resolvable:$true] %s151
      %s153 = sshll.u32 %s3, 4
      %s154 = int_to_ptr.hbm [resolvable:$true] %s153
      %159 = dma.vmem_to_hbm [thread:$0]  %s152, 256, %s154, [#allocation4], 128, 128, 8
    $region25: #{tpu_custom_call.1} parent=1 // pred_fallthru
      _
    // Predicated region
    $region26: #{tpu_custom_call.1} parent=1 // pred_check
      _
    $region27: #{tpu_custom_call.1} parent=1 // pred_check_branch
      %161 = sbr.rel (0) target = $region29
    $region28: #{tpu_custom_call.1} parent=1 // pred_region
      %163 = dma.done [#allocation4], 256
    $region29: #{tpu_custom_call.1} parent=1 // pred_fallthru
      _
    %164 = vsyncpa [#allocation3], 1
    %165 = vsyncpa [#allocation6], 1
    %166 = vsyncpa [#allocation4], 1

</llo_original>
